<compile_context>
chip_gen: v5e
topology: v5e:2x2
jax: 0.10.0
libtpu: 0.0.40
codegen_flags: <defaults>
</compile_context>

<pallas_src>
import jax
import jax.numpy as jnp
from jax import lax
from jax.experimental import pallas as pl
from jax.experimental.pallas import tpu as pltpu


def _round_up(a, b):
    return ((a + b - 1) // b) * b


def _make_kernel(tk):
    def kernel(x_ref, w_ref, b_ref, y_ref, mask_ref, acc_ref):
        j = pl.program_id(1)           # N (out_features) tile index
        k = pl.program_id(2)           # K (in_features) tile index -- reduction, innermost
        nk = pl.num_programs(2)

        @pl.when(k == 0)
        def _():
            acc_ref[...] = jnp.zeros_like(acc_ref)

        x = x_ref[...]                 # (tm, tk)
        # y += x @ W.T : contract x dim 1 with w dim 1 (weight kept in (out, in) layout).
        acc_ref[...] += lax.dot_general(
            x, w_ref[...],
            dimension_numbers=(((1,), (1,)), ((), ())),
            preferred_element_type=jnp.float32,
        )

        # Observer statistic: sum_{batch} |x| -- computed exactly once per (i, k) tile.
        # mask_ref is the (1, K_pad) partials row for this M block; it stays resident
        # across the whole (j, k) sweep, each k writes a disjoint 128-aligned lane slice.
        @pl.when(j == 0)
        def _():
            off = pl.multiple_of(k * tk, tk)
            mask_ref[:, pl.ds(off, tk)] = jnp.sum(
                jnp.abs(x).astype(jnp.float32), axis=0, keepdims=True)

        @pl.when(k == nk - 1)
        def _():
            y_ref[...] = (acc_ref[...] + b_ref[...].astype(jnp.float32)).astype(y_ref.dtype)

    return kernel


def final_linear_observer_forward(x, weight, bias, *,
                                  tm_target=256, tn_target=256, tk_target=512):
    """Fused nn.Linear forward + observer statistic.

    x:      (B, in_features)                float
    weight: (out_features, in_features)     PyTorch nn.Linear convention (NOT transposed)
    bias:   (out_features,)
    Returns (y, in_mask_delta):
      y:             (B, out_features)
      in_mask_delta: (in_features,) = |x|.sum(axis=0)   (the forward hook's increment)
    """
    B, in_f = x.shape
    out_f, in_f_w = weight.shape
    assert in_f == in_f_w

    # Tile sizes: MXU/lane aligned, capped by the (padded) problem size.
    tm = min(tm_target, _round_up(B, 8))
    tn = min(tn_target, _round_up(out_f, 128))
    tk = min(tk_target, _round_up(in_f, 128))

    M_pad = _round_up(B, tm)
    N_pad = _round_up(out_f, tn)
    K_pad = _round_up(in_f, tk)
    gm, gn, gk = M_pad // tm, N_pad // tn, K_pad // tk

    # Zero padding: padded x rows/cols contribute 0 to both the matmul and the |x| sum.
    x_p = jnp.pad(x, ((0, M_pad - B), (0, K_pad - in_f)))
    w_p = jnp.pad(weight, ((0, N_pad - out_f), (0, K_pad - in_f)))
    b_p = jnp.pad(bias, (0, N_pad - out_f)).reshape(1, N_pad).astype(jnp.float32)

    flops = 2 * M_pad * N_pad * K_pad
    bytes_accessed = 4 * (M_pad * K_pad + N_pad * K_pad + N_pad
                          + M_pad * N_pad + gm * K_pad)

    y_p, mask_part = pl.pallas_call(
        _make_kernel(tk),
        out_shape=(
            jax.ShapeDtypeStruct((M_pad, N_pad), x.dtype),       # y (padded)
            jax.ShapeDtypeStruct((gm, K_pad), jnp.float32),      # mask partials per M block
        ),
        grid_spec=pltpu.PrefetchScalarGridSpec(
            num_scalar_prefetch=0,
            grid=(gm, gn, gk),
            in_specs=[
                pl.BlockSpec((tm, tk), lambda i, j, k: (i, k)),   # x tile
                pl.BlockSpec((tn, tk), lambda i, j, k: (j, k)),   # weight tile (out, in)
                pl.BlockSpec((1, tn), lambda i, j, k: (0, j)),    # bias tile
            ],
            out_specs=(
                pl.BlockSpec((tm, tn), lambda i, j, k: (i, j)),   # y tile (resident over k)
                pl.BlockSpec((1, K_pad), lambda i, j, k: (i, 0)), # mask partials (resident per i)
            ),
            scratch_shapes=[pltpu.VMEM((tm, tn), jnp.float32)],   # f32 accumulator
        ),
        compiler_params=pltpu.CompilerParams(
            dimension_semantics=("parallel", "arbitrary", "arbitrary"),
        ),
        cost_estimate=pl.CostEstimate(
            flops=flops, transcendentals=0, bytes_accessed=bytes_accessed),
    )(x_p, w_p, b_p)

    y = y_p[:B, :out_f]
    in_mask_delta = mask_part.sum(axis=0)[:in_f]
    return y, in_mask_delta


class FinalLinearObserverJax:
    """Minimal stateful mirror of the PyTorch module (observer state kept in plain JAX)."""

    def __init__(self, weight, bias):
        self.weight = weight            # (out, in) -- PyTorch convention
        self.bias = bias                # (out,)
        self.in_mask = jnp.zeros((weight.shape[1],), jnp.float32)

    def __call__(self, x):
        y, mask_delta = final_linear_observer_forward(x, self.weight, self.bias)
        # forward hook: self.in_mask += x.abs().sum(0)
        self.in_mask = self.in_mask + mask_delta
        return y


if __name__ == "__main__":
    key = jax.random.PRNGKey(0)
    k_x, k_w, k_b = jax.random.split(key, 3)

    B, in_f, out_f = 8, 32, 16          # small shapes consistent with nn.Linear(in_f, out_f)

    # PyTorch-style uniform(-1/sqrt(in), 1/sqrt(in)) init.
    bound = 1.0 / jnp.sqrt(jnp.float32(in_f))
    weight = jax.random.uniform(k_w, (out_f, in_f), jnp.float32, -bound, bound)
    bias = jax.random.uniform(k_b, (out_f,), jnp.float32, -bound, bound)
    x = jax.random.normal(k_x, (B, in_f), jnp.float32)

    mod = FinalLinearObserverJax(weight, bias)

    y = mod(x)                          # first call
    y = jax.block_until_ready(y)
    y2 = mod(x)                         # second call exercises the running observer state
    y2 = jax.block_until_ready(y2)
    in_mask = jax.block_until_ready(mod.in_mask)

    # Reference (plain JAX)
    y_ref = x @ weight.T + bias
    mask_ref = jnp.abs(x).sum(axis=0)

    assert y.shape == (B, out_f)
    assert jnp.allclose(y, y_ref, atol=1e-4, rtol=1e-4)
    assert jnp.allclose(y2, y_ref, atol=1e-4, rtol=1e-4)
    assert jnp.allclose(in_mask, 2.0 * mask_ref, atol=1e-4, rtol=1e-4)

    print("KERNEL_OK")
</pallas_src>

<mosaic_0001>
module attributes {stable_mosaic.version = 11 : i64} {
  func.func @kernel(%arg0: i32, %arg1: i32, %arg2: i32, %arg3: memref<8x128xf32, #tpu.memory_space<vmem>>, %arg4: memref<128x128xf32, #tpu.memory_space<vmem>>, %arg5: memref<1x128xf32, #tpu.memory_space<vmem>>, %arg6: memref<8x128xf32, #tpu.memory_space<vmem>>, %arg7: memref<1x128xf32, #tpu.memory_space<vmem>>, %arg8: memref<8x128xf32, #tpu.memory_space<vmem>>) attributes {dimension_semantics = [#tpu.dimension_semantics<parallel>, #tpu.dimension_semantics<arbitrary>, #tpu.dimension_semantics<arbitrary>], iteration_bounds = array<i64: 1, 1, 1>, scalar_prefetch = 0 : i64, scratch_operands = 1 : i64, tpu.core_type = #tpu.core_type<tc>, window_params = [{transform_indices = @transform_0, window_bounds = array<i64: 8, 128>}, {transform_indices = @transform_1, window_bounds = array<i64: 128, 128>}, {transform_indices = @transform_2, window_bounds = array<i64: 1, 128>}, {transform_indices = @transform_3, window_bounds = array<i64: 8, 128>}, {transform_indices = @transform_4, window_bounds = array<i64: 1, 128>}]} {
    %c0_i32 = arith.constant 0 : i32
    %0 = arith.cmpi eq, %arg2, %c0_i32 : i32
    %1 = arith.extui %0 : i1 to i32
    %c0_i32_0 = arith.constant 0 : i32
    %2 = arith.cmpi ne, %1, %c0_i32_0 : i32
    scf.if %2 {
      %cst_12 = arith.constant 0.000000e+00 : f32
      %15 = vector.broadcast %cst_12 : f32 to vector<8x128xf32>
      %c0_13 = arith.constant 0 : index
      %c0_14 = arith.constant 0 : index
      %16 = vector.load %arg8[%c0_13, %c0_14] : memref<8x128xf32, #tpu.memory_space<vmem>>, vector<8x128xf32>
      tpu.vector_store %arg8[%c0_13, %c0_14], %15 {strides = array<i32>} : memref<8x128xf32, #tpu.memory_space<vmem>>, vector<8x128xf32>,
    } else {
    }
    %c0 = arith.constant 0 : index
    %c0_1 = arith.constant 0 : index
    %3 = vector.load %arg3[%c0, %c0_1] : memref<8x128xf32, #tpu.memory_space<vmem>>, vector<8x128xf32>
    %c0_2 = arith.constant 0 : index
    %c0_3 = arith.constant 0 : index
    %4 = vector.load %arg8[%c0_2, %c0_3] : memref<8x128xf32, #tpu.memory_space<vmem>>, vector<8x128xf32>
    %c0_4 = arith.constant 0 : index
    %c0_5 = arith.constant 0 : index
    %5 = vector.load %arg4[%c0_4, %c0_5] : memref<128x128xf32, #tpu.memory_space<vmem>>, vector<128x128xf32>
    %cst = arith.constant dense<0.000000e+00> : vector<8x128xf32>
    %6 = tpu.matmul %3, %5, %cst {dimension_numbers = #tpu.dot_dimension_numbers<[1], [1], [0], [0], [0, 0, 1, 0], [], []>} : vector<8x128xf32>, vector<128x128xf32>, vector<8x128xf32> -> vector<8x128xf32>
    %7 = arith.addf %4, %6 : vector<8x128xf32>
    %c0_6 = arith.constant 0 : index
    %c0_7 = arith.constant 0 : index
    %8 = vector.load %arg8[%c0_6, %c0_7] : memref<8x128xf32, #tpu.memory_space<vmem>>, vector<8x128xf32>
    tpu.vector_store %arg8[%c0_6, %c0_7], %7 {strides = array<i32>} : memref<8x128xf32, #tpu.memory_space<vmem>>, vector<8x128xf32>,
    %c0_i32_8 = arith.constant 0 : i32
    %9 = arith.cmpi eq, %arg1, %c0_i32_8 : i32
    %10 = arith.extui %9 : i1 to i32
    %c0_i32_9 = arith.constant 0 : i32
    %11 = arith.cmpi ne, %10, %c0_i32_9 : i32
    scf.if %11 {
      %c128_i32 = arith.constant 128 : i32
      %15 = arith.muli %arg2, %c128_i32 : i32
      %16 = tpu.assume_multiple %15, 128 : i32
      %17 = math.absf %3 : vector<8x128xf32>
      %cst_12 = arith.constant dense<0.000000e+00> : vector<128xf32>
      %18 = vector.multi_reduction <add>, %17, %cst_12 [0] : vector<8x128xf32> to vector<128xf32>
      %19 = vector.shape_cast %18 : vector<128xf32> to vector<1x128xf32>
      %c0_13 = arith.constant 0 : index
      %20 = arith.index_cast %16 : i32 to index
      %21 = vector.load %arg7[%c0_13, %20] : memref<1x128xf32, #tpu.memory_space<vmem>>, vector<1x128xf32>
      tpu.vector_store %arg7[%c0_13, %20], %19 {strides = array<i32>} : memref<1x128xf32, #tpu.memory_space<vmem>>, vector<1x128xf32>,
    } else {
    }
    %c0_i32_10 = arith.constant 0 : i32
    %12 = arith.cmpi eq, %arg2, %c0_i32_10 : i32
    %13 = arith.extui %12 : i1 to i32
    %c0_i32_11 = arith.constant 0 : i32
    %14 = arith.cmpi ne, %13, %c0_i32_11 : i32
    scf.if %14 {
      %c0_12 = arith.constant 0 : index
      %c0_13 = arith.constant 0 : index
      %15 = vector.load %arg8[%c0_12, %c0_13] : memref<8x128xf32, #tpu.memory_space<vmem>>, vector<8x128xf32>
      %c0_14 = arith.constant 0 : index
      %c0_15 = arith.constant 0 : index
      %16 = vector.load %arg5[%c0_14, %c0_15] : memref<1x128xf32, #tpu.memory_space<vmem>>, vector<1x128xf32>
      %17 = vector.broadcast %16 : vector<1x128xf32> to vector<8x128xf32>
      %18 = arith.addf %15, %17 : vector<8x128xf32>
      %c0_16 = arith.constant 0 : index
      %c0_17 = arith.constant 0 : index
      %19 = vector.load %arg6[%c0_16, %c0_17] : memref<8x128xf32, #tpu.memory_space<vmem>>, vector<8x128xf32>
      tpu.vector_store %arg6[%c0_16, %c0_17], %18 {strides = array<i32>} : memref<8x128xf32, #tpu.memory_space<vmem>>, vector<8x128xf32>,
    } else {
    }
    return
  }
  func.func @transform_0(%arg0: i32, %arg1: i32, %arg2: i32) -> (i32, i32) {
    %c0_i32 = arith.constant 0 : i32
    return %arg0, %arg2 : i32, i32
  }
  func.func @transform_1(%arg0: i32, %arg1: i32, %arg2: i32) -> (i32, i32) {
    %c0_i32 = arith.constant 0 : i32
    return %arg1, %arg2 : i32, i32
  }
  func.func @transform_2(%arg0: i32, %arg1: i32, %arg2: i32) -> (i32, i32) {
    %c0_i32 = arith.constant 0 : i32
    %c0_i32_0 = arith.constant 0 : i32
    return %c0_i32, %arg1 : i32, i32
  }
  func.func @transform_3(%arg0: i32, %arg1: i32, %arg2: i32) -> (i32, i32) {
    %c0_i32 = arith.constant 0 : i32
    return %arg0, %arg1 : i32, i32
  }
  func.func @transform_4(%arg0: i32, %arg1: i32, %arg2: i32) -> (i32, i32) {
    %c0_i32 = arith.constant 0 : i32
    %c0_i32_0 = arith.constant 0 : i32
    return %arg0, %c0_i32 : i32, i32
  }
}

</mosaic_0001>

<llo_original>
// kernel: tpu_custom_call.1
$region0: #{tpu_custom_call.1}
  #allocation0 [shape = 'u32[]', space=smem, size = 0x4, offset = 0x4, fixed_abs, tag = 'smem constant byte address 0x4 - core index']
  #allocation1 [shape = 'u32[72,128]{1,0:T(1,128)}', space=vmem, size = 0x9000, scoped, tag = 'internal scratch']
  #allocation2 [shape = 'f32[8,128]{1,0:T(8,128)}', space=vmem, size = 0x1000, scoped, tag = 'scratch operand']
  %s0 = inlined_call_operand.hbm [shape: f32[8,128], index: 0, kind: input, shape index: {}]
  %s1 = inlined_call_operand.hbm [shape: f32[128,128], index: 1, kind: input, shape index: {}]
  %s2 = inlined_call_operand.vmem [shape: f32[1,128], index: 2, kind: input, shape index: {}]
  %s3 = inlined_call_operand.hbm [shape: f32[8,128], index: 3, kind: output, shape index: {0}]
  %s4 = inlined_call_operand.hbm [shape: f32[1,128], index: 4, kind: output, shape index: {1}]
  %5 = xla_tuple %s3, %s4
  %s6 = sld [smem:[#allocation0]]
  $region50: #{tpu_custom_call.1} parent=0
    _
  %s8 = ssub.s32 1, %s6
  %s9 = scalar_select 0, %s8, %s6
  $region1: #{tpu_custom_call.1} parent=0
    #allocation3 [shape = 'u8[4096]{0}', space=vmem, size = 0x1000, scoped, tag = 'input window, operand 0, single buffered']
    #allocation4 [shape = 's32[1]{0}', space=sflag, size = 0x4, scoped, tag = 'scoped memory for tpu_custom_call.1']
    #allocation5 [shape = 's32[1]{0}', space=sflag, size = 0x4, scoped, tag = 'scoped memory for tpu_custom_call.1']
    #allocation6 [shape = 'u8[65536]{0}', space=vmem, size = 0x10000, scoped, tag = 'input window, operand 1, single buffered']
    #allocation7 [shape = 's32[1]{0}', space=sflag, size = 0x4, scoped, tag = 'scoped memory for tpu_custom_call.1']
    #allocation8 [shape = 'u8[4096]{0}', space=vmem, size = 0x1000, scoped, tag = 'output window, operand 0, single buffered']
    #allocation9 [shape = 'u8[512]{0}', space=vmem, size = 0x400, scoped, tag = 'output window, operand 1, single buffered']
    #allocation10 [shape = 's32[1]{0}', space=sflag, size = 0x4, scoped, tag = 'scoped memory for tpu_custom_call.1']
    %10 = vsyncpa [#allocation4], 0
    %11 = vsyncpa [#allocation7], 0
    %12 = vsyncpa [#allocation5], 0
    %13 = vsyncpa [#allocation10], 0
    // Predicated region
    $region2: #{tpu_custom_call.1} parent=1 // pred_check
      _
    $region3: #{tpu_custom_call.1} parent=1 // pred_check_branch
      %15 = sbr.rel (0) target = $region5
    $region4: #{tpu_custom_call.1} parent=1 // pred_region
      %17 = vsyncadd [#allocation4], 0
      %s19 = sshll.u32 %s0, 4
      %s20 = int_to_ptr.hbm [resolvable:$true] %s19
      %s21 = sshll.u32 [#allocation3], 4
      %s22 = int_to_ptr.vmem [resolvable:$true] %s21
      %24 = dma.hbm_to_vmem [thread:$0]  %s20, 128, %s22, [#allocation4]
    $region5: #{tpu_custom_call.1} parent=1 // pred_fallthru
      _
    // Predicated region
    $region6: #{tpu_custom_call.1} parent=1 // pred_check
      _
    $region7: #{tpu_custom_call.1} parent=1 // pred_check_branch
      %26 = sbr.rel (0) target = $region9
    $region8: #{tpu_custom_call.1} parent=1 // pred_region
      %28 = vsyncadd [#allocation7], 0
      %s29 = sshll.u32 %s1, 4
      %s30 = int_to_ptr.hbm [resolvable:$true] %s29
      %s31 = sshll.u32 [#allocation6], 4
      %s32 = int_to_ptr.vmem [resolvable:$true] %s31
      %37 = dma.hbm_to_vmem [thread:$0]  %s30, 2048, %s32, [#allocation7], 128, 128, 8
    $region9: #{tpu_custom_call.1} parent=1 // pred_fallthru
      _
    // Predicated region
    $region10: #{tpu_custom_call.1} parent=1 // pred_check
      _
    $region11: #{tpu_custom_call.1} parent=1 // pred_check_branch
      %39 = sbr.rel (0) target = $region13
    $region12: #{tpu_custom_call.1} parent=1 // pred_region
      _
    $region13: #{tpu_custom_call.1} parent=1 // pred_fallthru
      _
    // Predicated region
    $region14: #{tpu_custom_call.1} parent=1 // pred_check
      _
    $region15: #{tpu_custom_call.1} parent=1 // pred_check_branch
      %41 = sbr.rel (0) target = $region17
    $region16: #{tpu_custom_call.1} parent=1 // pred_region
      %43 = dma.done [#allocation4], 128
    $region17: #{tpu_custom_call.1} parent=1 // pred_fallthru
      _
    // Predicated region
    $region18: #{tpu_custom_call.1} parent=1 // pred_check
      _
    $region19: #{tpu_custom_call.1} parent=1 // pred_check_branch
      %45 = sbr.rel (0) target = $region21
    $region20: #{tpu_custom_call.1} parent=1 // pred_region
      %47 = dma.done [#allocation7], 2048
    $region21: #{tpu_custom_call.1} parent=1 // pred_fallthru
      _
    %p48 = scmp.eq.s32.totalorder 0, 0
    // Predicated region
    $region22: #{tpu_custom_call.1} parent=1 // pred_check
      %p49 = pneg %p48
    $region23: #{tpu_custom_call.1} parent=1 // pred_check_branch
      %51 = sbr.rel (%p49) target = $region25
    $region24: #{tpu_custom_call.1} parent=1 // pred_region
      %52 = vst [vmem:[#allocation2] sm:$0xff] 0.0
    $region25: #{tpu_custom_call.1} parent=1 // pred_fallthru
      _
    %v53 = vld [vmem:[#allocation3] sm:$0xff]
    %v54 = vld [vmem:[#allocation2] sm:$0xff]
    %v55 = vld [vmem:[#allocation6] sm:$0xff]
    %v56 = vld [vmem:[#allocation6 + $0x8] sm:$0xff]
    %v57 = vld [vmem:[#allocation6 + $0x10] sm:$0xff]
    %v58 = vld [vmem:[#allocation6 + $0x18] sm:$0xff]
    %v59 = vld [vmem:[#allocation6 + $0x20] sm:$0xff]
    %v60 = vld [vmem:[#allocation6 + $0x28] sm:$0xff]
    %v61 = vld [vmem:[#allocation6 + $0x30] sm:$0xff]
    %v62 = vld [vmem:[#allocation6 + $0x38] sm:$0xff]
    %v63 = vld [vmem:[#allocation6 + $0x40] sm:$0xff]
    %v64 = vld [vmem:[#allocation6 + $0x48] sm:$0xff]
    %v65 = vld [vmem:[#allocation6 + $0x50] sm:$0xff]
    %v66 = vld [vmem:[#allocation6 + $0x58] sm:$0xff]
    %v67 = vld [vmem:[#allocation6 + $0x60] sm:$0xff]
    %v68 = vld [vmem:[#allocation6 + $0x68] sm:$0xff]
    %v69 = vld [vmem:[#allocation6 + $0x70] sm:$0xff]
    %v70 = vld [vmem:[#allocation6 + $0x78] sm:$0xff]
    %71 = vmatpush.xpose.msra.mxu0 %v70
    %72 = vmatpush.xpose.msra.mxu0 %v69
    %73 = vmatpush.xpose.msra.mxu0 %v68
    %74 = vmatpush.xpose.msra.mxu0 %v67
    %75 = vmatpush.xpose.msra.mxu0 %v66
    %76 = vmatpush.xpose.msra.mxu0 %v65
    %77 = vmatpush.xpose.msra.mxu0 %v64
    %78 = vmatpush.xpose.msra.mxu0 %v63
    %79 = vmatpush.xpose.msra.mxu0 %v62
    %80 = vmatpush.xpose.msra.mxu0 %v61
    %81 = vmatpush.xpose.msra.mxu0 %v60
    %82 = vmatpush.xpose.msra.mxu0 %v59
    %83 = vmatpush.xpose.msra.mxu0 %v58
    %84 = vmatpush.xpose.msra.mxu0 %v57
    %85 = vmatpush.xpose.msra.mxu0 %v56
    %86 = vmatpush.xpose.msra.mxu0 %v55
    %87 = vmatmul.f32.gmra.mxu0 %v53
    %v88 = vpop.f32.mrf.mxu0
    %v89 = vadd.f32 0.0, %v88
    %90 = vdwg.mxu0
    %v91 = vadd.f32 %v54, %v89
    %92 = vst [vmem:[#allocation2] sm:$0xff] %v91
    %p93 = scmp.eq.s32.totalorder 0, 0
    // Predicated region
    $region26: #{tpu_custom_call.1} parent=1 // pred_check
      %p94 = pneg %p93
    $region27: #{tpu_custom_call.1} parent=1 // pred_check_branch
      %96 = sbr.rel (%p94) target = $region29
    $region28: #{tpu_custom_call.1} parent=1 // pred_region
      %s97 = smul.u32 0, 128
      %v98 = vand.u32 2147483647, %v53
      %v99 = vrot.slane %v98, 4
      %v100 = vadd.f32 %v98, %v99
      %v101 = vrot.slane %v100, 2
      %v102 = vadd.f32 %v100, %v101
      %v103 = vrot.slane %v102, 1
      %v104 = vadd.f32 %v102, %v103
      %s105 = sshra.s32 %s97, 7
      %s106 = sand.u32 %s97, 127
      %s107 = scalar_lea.vmem [#allocation9], %s105
      %108 = vst [vmem:[%s107] sm:$0x1] %v104
    $region29: #{tpu_custom_call.1} parent=1 // pred_fallthru
      _
    // Predicated region
    $region30: #{tpu_custom_call.1} parent=1 // pred_check
      %p109 = pneg %p48
    $region31: #{tpu_custom_call.1} parent=1 // pred_check_branch
      %111 = sbr.rel (%p109) target = $region33
    $region32: #{tpu_custom_call.1} parent=1 // pred_region
      %v112 = vld [vmem:[#allocation2] sm:$0xff]
      %v113 = vld [vmem:[%s2] sm:$0x1]
      %v115 = vperm.slane %v113, 0
      %v117 = vadd.f32 %v112, %v115
      %118 = vst [vmem:[#allocation8] sm:$0xff] %v117
    $region33: #{tpu_custom_call.1} parent=1 // pred_fallthru
      _
    // Predicated region
    $region34: #{tpu_custom_call.1} parent=1 // pred_check
      _
    $region35: #{tpu_custom_call.1} parent=1 // pred_check_branch
      %120 = sbr.rel (0) target = $region37
    $region36: #{tpu_custom_call.1} parent=1 // pred_region
      %122 = vsyncadd [#allocation5], 0
      %s124 = sshll.u32 [#allocation8], 4
      %s125 = int_to_ptr.vmem [resolvable:$true] %s124
      %s126 = sshll.u32 %s3, 4
      %s127 = int_to_ptr.hbm [resolvable:$true] %s126
      %129 = dma.vmem_to_hbm [thread:$0]  %s125, 128, %s127, [#allocation5]
    $region37: #{tpu_custom_call.1} parent=1 // pred_fallthru
      _
    // Predicated region
    $region38: #{tpu_custom_call.1} parent=1 // pred_check
      _
    $region39: #{tpu_custom_call.1} parent=1 // pred_check_branch
      %131 = sbr.rel (0) target = $region41
    $region40: #{tpu_custom_call.1} parent=1 // pred_region
      %133 = vsyncadd [#allocation10], 0
      %s135 = sshll.u32 [#allocation9], 4
      %s136 = int_to_ptr.vmem [resolvable:$true] %s135
      %s137 = sshll.u32 %s4, 4
      %s138 = int_to_ptr.hbm [resolvable:$true] %s137
      %140 = dma.vmem_to_hbm [thread:$0]  %s136, 16, %s138, [#allocation10]
    $region41: #{tpu_custom_call.1} parent=1 // pred_fallthru
      _
    // Predicated region
    $region42: #{tpu_custom_call.1} parent=1 // pred_check
      _
    $region43: #{tpu_custom_call.1} parent=1 // pred_check_branch
      %142 = sbr.rel (0) target = $region45
    $region44: #{tpu_custom_call.1} parent=1 // pred_region
      %144 = dma.done [#allocation5], 128
    $region45: #{tpu_custom_call.1} parent=1 // pred_fallthru
      _
    // Predicated region
    $region46: #{tpu_custom_call.1} parent=1 // pred_check
      _
    $region47: #{tpu_custom_call.1} parent=1 // pred_check_branch
      %146 = sbr.rel (0) target = $region49
    $region48: #{tpu_custom_call.1} parent=1 // pred_region
      %148 = dma.done [#allocation10], 16
    $region49: #{tpu_custom_call.1} parent=1 // pred_fallthru
      _
    %149 = vsyncpa [#allocation4], 1
    %150 = vsyncpa [#allocation7], 1
    %151 = vsyncpa [#allocation5], 1
    %152 = vsyncpa [#allocation10], 1

</llo_original>
